<compile_context>
chip_gen: v6e
topology: v6e:2x2x1
jax: 0.10.0
libtpu: 0.0.40
codegen_flags: <defaults>
</compile_context>

<pallas_src>
import jax
import jax.numpy as jnp
from jax.experimental import pallas as pl
from jax.experimental.pallas import tpu as pltpu


def encoder_kernel(x_ref,                  # VMEM (bb, D_in)
                   w1_ref, b1_ref,         # VMEM (D_in, H), (1, H)
                   wh_ref, bh_ref,         # VMEM (H, 2L),   (1, 2L)   [wm|wv], [bm|bv]
                   eps_ref,                # VMEM (bb, L)     uniform [0,1)
                   out_ref):               # VMEM (bb, OUT_W) packed [z|mean|log_var|0...]
    L = eps_ref.shape[-1]

    x = x_ref[...]

    # Hidden layer + ReLU (MXU matmul, f32 accumulation).
    h = jnp.dot(x, w1_ref[...], preferred_element_type=jnp.float32) + b1_ref[...]
    h = jnp.maximum(h, 0.0)

    # Fused mean / log-variance heads: one matmul on the concatenated weights.
    heads = jnp.dot(h, wh_ref[...], preferred_element_type=jnp.float32) + bh_ref[...]
    mean = heads[:, :L]
    log_var = heads[:, L:2 * L]

    std = jnp.exp(0.5 * log_var)
    z = mean + std * eps_ref[...]

    # Pack all three results into one lane-dense slab and store once.
    packed = jnp.concatenate([z, mean, log_var], axis=-1)          # (bb, 3L)
    pad = out_ref.shape[-1] - 3 * L
    if pad > 0:
        packed = jnp.concatenate(
            [packed, jnp.zeros((packed.shape[0], pad), packed.dtype)], axis=-1)
    out_ref[...] = packed


def encoder_forward(x, params, key):
    """x: (B, input_dim) f32. params: dict of transposed weights/biases.

    Returns (z, mean, log_var), each (B, latent_dim) f32.
    """
    B, D_in = x.shape
    H = params["w1"].shape[1]
    L = params["wm"].shape[1]

    # eps ~ U[0, 1) (matches torch.rand_like); generated outside the kernel so
    # the kernel lowers on TPU and in interpret mode alike.
    eps = jax.random.uniform(key, (B, L), dtype=jnp.float32)

    # Fuse the two heads on the host: (H, 2L) weights, (1, 2L) bias.
    w_heads = jnp.concatenate([params["wm"], params["wv"]], axis=1)
    b_heads = jnp.concatenate([params["bm"], params["bv"]], axis=1)

    # Lane-dense packed output width (>= 3L, multiple of 128).
    out_w = max(128, pl.cdiv(3 * L, 128) * 128)

    # Batch tiling: single block for small B; 256-row blocks (parallel across
    # TensorCores on v7x) for large B.
    block_b = B if B <= 256 else 256
    b_pad = pl.cdiv(B, block_b) * block_b
    if b_pad != B:
        x = jnp.pad(x, ((0, b_pad - B), (0, 0)))
        eps = jnp.pad(eps, ((0, b_pad - B), (0, 0)))
    grid = (b_pad // block_b,)

    cost = pl.CostEstimate(
        flops=2 * b_pad * D_in * H + 2 * b_pad * H * (2 * L) + 6 * b_pad * L,
        transcendentals=b_pad * L,
        bytes_accessed=4 * (b_pad * D_in + D_in * H + H + H * 2 * L + 2 * L
                            + b_pad * L + b_pad * out_w),
    )

    packed = pl.pallas_call(
        encoder_kernel,
        out_shape=jax.ShapeDtypeStruct((b_pad, out_w), jnp.float32),
        grid_spec=pltpu.PrefetchScalarGridSpec(
            num_scalar_prefetch=0,
            grid=grid,
            in_specs=[
                pl.BlockSpec((block_b, D_in), lambda i: (i, 0)),   # x
                pl.BlockSpec((D_in, H), lambda i: (0, 0)),         # w1
                pl.BlockSpec((1, H), lambda i: (0, 0)),            # b1
                pl.BlockSpec((H, 2 * L), lambda i: (0, 0)),        # w_heads
                pl.BlockSpec((1, 2 * L), lambda i: (0, 0)),        # b_heads
                pl.BlockSpec((block_b, L), lambda i: (i, 0)),      # eps
            ],
            out_specs=pl.BlockSpec((block_b, out_w), lambda i: (i, 0)),
        ),
        compiler_params=pltpu.CompilerParams(
            dimension_semantics=("parallel",)),
        cost_estimate=cost,
    )(x, params["w1"], params["b1"], w_heads, b_heads, eps)

    z = packed[:B, 0:L]
    mean = packed[:B, L:2 * L]
    log_var = packed[:B, 2 * L:3 * L]
    return z, mean, log_var, eps


def init_params(key, input_dim, hidden_dim, latent_dim):
    """Deterministic synthetic parameters (shapes match the nn.Linear layers).

    PyTorch nn.Linear weight is (out, in); we store the transpose (in, out)
    so the kernel can compute x @ W directly.
    """
    k1, k2, k3, k4, k5, k6 = jax.random.split(key, 6)
    scale = 0.1
    return {
        "w1": scale * jax.random.normal(k1, (input_dim, hidden_dim), jnp.float32),
        "b1": scale * jax.random.normal(k2, (1, hidden_dim), jnp.float32),
        "wm": scale * jax.random.normal(k3, (hidden_dim, latent_dim), jnp.float32),
        "bm": scale * jax.random.normal(k4, (1, latent_dim), jnp.float32),
        "wv": scale * jax.random.normal(k5, (hidden_dim, latent_dim), jnp.float32),
        "bv": scale * jax.random.normal(k6, (1, latent_dim), jnp.float32),
    }


def encoder_reference(x, params, eps):
    """Pure-JAX reference of the full forward pass."""
    h = jnp.maximum(x @ params["w1"] + params["b1"], 0.0)
    mean = h @ params["wm"] + params["bm"]
    log_var = h @ params["wv"] + params["bv"]
    std = jnp.exp(0.5 * log_var)
    z = mean + std * eps
    return z, mean, log_var


if __name__ == "__main__":
    B, INPUT_DIM, HIDDEN_DIM, LATENT_DIM = 8, 32, 64, 16

    key = jax.random.PRNGKey(0)
    kx, kp, keps = jax.random.split(key, 3)
    x = jax.random.normal(kx, (B, INPUT_DIM), jnp.float32)
    params = init_params(kp, INPUT_DIM, HIDDEN_DIM, LATENT_DIM)

    z, mean, log_var, eps = encoder_forward(x, params, keps)
    jax.block_until_ready((z, mean, log_var))

    # Check against the pure-JAX reference (same eps).
    z_ref, mean_ref, logvar_ref = encoder_reference(x, params, eps)
    assert z.shape == (B, LATENT_DIM)
    assert mean.shape == (B, LATENT_DIM)
    assert log_var.shape == (B, LATENT_DIM)
    assert jnp.allclose(mean, mean_ref, atol=1e-3, rtol=1e-3)
    assert jnp.allclose(log_var, logvar_ref, atol=1e-3, rtol=1e-3)
    assert jnp.allclose(z, z_ref, atol=1e-3, rtol=1e-3)
    assert bool(jnp.all(jnp.isfinite(z)))
    # eps produced by rand_like semantics: uniform in [0, 1).
    assert bool(jnp.all((eps >= 0.0) & (eps < 1.0)))

    print("KERNEL_OK")
</pallas_src>

<mosaic_0001>
module attributes {stable_mosaic.version = 11 : i64} {
  func.func @encoder_kernel(%arg0: i32, %arg1: memref<8x32xf32, #tpu.memory_space<vmem>>, %arg2: memref<32x64xf32, #tpu.memory_space<vmem>>, %arg3: memref<1x64xf32, #tpu.memory_space<vmem>>, %arg4: memref<64x32xf32, #tpu.memory_space<vmem>>, %arg5: memref<1x32xf32, #tpu.memory_space<vmem>>, %arg6: memref<8x16xf32, #tpu.memory_space<vmem>>, %arg7: memref<8x128xf32, #tpu.memory_space<vmem>>) attributes {dimension_semantics = [#tpu.dimension_semantics<parallel>], iteration_bounds = array<i64: 1>, scalar_prefetch = 0 : i64, scratch_operands = 0 : i64, tpu.core_type = #tpu.core_type<tc>, window_params = [{transform_indices = @transform_0, window_bounds = array<i64: 8, 32>}, {pipeline_mode = #tpu.pipeline_mode<synchronous>, transform_indices = @transform_1, window_bounds = array<i64: 32, 64>}, {pipeline_mode = #tpu.pipeline_mode<synchronous>, transform_indices = @transform_2, window_bounds = array<i64: 1, 64>}, {pipeline_mode = #tpu.pipeline_mode<synchronous>, transform_indices = @transform_3, window_bounds = array<i64: 64, 32>}, {pipeline_mode = #tpu.pipeline_mode<synchronous>, transform_indices = @transform_4, window_bounds = array<i64: 1, 32>}, {transform_indices = @transform_5, window_bounds = array<i64: 8, 16>}, {transform_indices = @transform_6, window_bounds = array<i64: 8, 128>}]} {
    %c0 = arith.constant 0 : index
    %c0_0 = arith.constant 0 : index
    %0 = vector.load %arg1[%c0, %c0_0] : memref<8x32xf32, #tpu.memory_space<vmem>>, vector<8x32xf32>
    %c0_1 = arith.constant 0 : index
    %c0_2 = arith.constant 0 : index
    %1 = vector.load %arg2[%c0_1, %c0_2] : memref<32x64xf32, #tpu.memory_space<vmem>>, vector<32x64xf32>
    %cst = arith.constant dense<0.000000e+00> : vector<8x64xf32>
    %2 = tpu.matmul %0, %1, %cst {dimension_numbers = #tpu.dot_dimension_numbers<[1], [0], [0], [1], [0, 0, 1, 1], [], []>} : vector<8x32xf32>, vector<32x64xf32>, vector<8x64xf32> -> vector<8x64xf32>
    %c0_3 = arith.constant 0 : index
    %c0_4 = arith.constant 0 : index
    %3 = vector.load %arg3[%c0_3, %c0_4] : memref<1x64xf32, #tpu.memory_space<vmem>>, vector<1x64xf32>
    %4 = vector.broadcast %3 : vector<1x64xf32> to vector<8x64xf32>
    %5 = arith.addf %2, %4 : vector<8x64xf32>
    %cst_5 = arith.constant 0.000000e+00 : f32
    %6 = vector.broadcast %cst_5 : f32 to vector<8x64xf32>
    %7 = arith.maximumf %5, %6 : vector<8x64xf32>
    %c0_6 = arith.constant 0 : index
    %c0_7 = arith.constant 0 : index
    %8 = vector.load %arg4[%c0_6, %c0_7] : memref<64x32xf32, #tpu.memory_space<vmem>>, vector<64x32xf32>
    %cst_8 = arith.constant dense<0.000000e+00> : vector<8x32xf32>
    %9 = tpu.matmul %7, %8, %cst_8 {dimension_numbers = #tpu.dot_dimension_numbers<[1], [0], [0], [1], [0, 0, 1, 1], [], []>} : vector<8x64xf32>, vector<64x32xf32>, vector<8x32xf32> -> vector<8x32xf32>
    %c0_9 = arith.constant 0 : index
    %c0_10 = arith.constant 0 : index
    %10 = vector.load %arg5[%c0_9, %c0_10] : memref<1x32xf32, #tpu.memory_space<vmem>>, vector<1x32xf32>
    %11 = vector.broadcast %10 : vector<1x32xf32> to vector<8x32xf32>
    %12 = arith.addf %9, %11 : vector<8x32xf32>
    %13 = vector.extract_strided_slice %12 {offsets = [0, 0], sizes = [8, 16], strides = [1, 1]} : vector<8x32xf32> to vector<8x16xf32>
    %14 = vector.extract_strided_slice %12 {offsets = [0, 16], sizes = [8, 16], strides = [1, 1]} : vector<8x32xf32> to vector<8x16xf32>
    %cst_11 = arith.constant 5.000000e-01 : f32
    %15 = vector.broadcast %cst_11 : f32 to vector<8x16xf32>
    %16 = arith.mulf %15, %14 : vector<8x16xf32>
    %17 = math.exp %16 : vector<8x16xf32>
    %c0_12 = arith.constant 0 : index
    %c0_13 = arith.constant 0 : index
    %18 = vector.load %arg6[%c0_12, %c0_13] : memref<8x16xf32, #tpu.memory_space<vmem>>, vector<8x16xf32>
    %19 = arith.mulf %17, %18 : vector<8x16xf32>
    %20 = arith.addf %13, %19 : vector<8x16xf32>
    %21 = tpu.concatenate %20, %13, %14 in 1 : vector<8x16xf32>, vector<8x16xf32>, vector<8x16xf32> -> vector<8x48xf32>
    %cst_14 = arith.constant 0.000000e+00 : f32
    %22 = vector.broadcast %cst_14 : f32 to vector<8x80xf32>
    %23 = tpu.concatenate %21, %22 in 1 : vector<8x48xf32>, vector<8x80xf32> -> vector<8x128xf32>
    %c0_15 = arith.constant 0 : index
    %c0_16 = arith.constant 0 : index
    %24 = vector.load %arg7[%c0_15, %c0_16] : memref<8x128xf32, #tpu.memory_space<vmem>>, vector<8x128xf32>
    tpu.vector_store %arg7[%c0_15, %c0_16], %23 {strides = array<i32>} : memref<8x128xf32, #tpu.memory_space<vmem>>, vector<8x128xf32>,
    return
  }
  func.func @transform_0(%arg0: i32) -> (i32, i32) {
    %c0_i32 = arith.constant 0 : i32
    %c0_i32_0 = arith.constant 0 : i32
    return %arg0, %c0_i32 : i32, i32
  }
  func.func @transform_1(%arg0: i32) -> (i32, i32) {
    %c0_i32 = arith.constant 0 : i32
    %c0_i32_0 = arith.constant 0 : i32
    %c0_i32_1 = arith.constant 0 : i32
    return %c0_i32, %c0_i32_0 : i32, i32
  }
  func.func @transform_2(%arg0: i32) -> (i32, i32) {
    %c0_i32 = arith.constant 0 : i32
    %c0_i32_0 = arith.constant 0 : i32
    %c0_i32_1 = arith.constant 0 : i32
    return %c0_i32, %c0_i32_0 : i32, i32
  }
  func.func @transform_3(%arg0: i32) -> (i32, i32) {
    %c0_i32 = arith.constant 0 : i32
    %c0_i32_0 = arith.constant 0 : i32
    %c0_i32_1 = arith.constant 0 : i32
    return %c0_i32, %c0_i32_0 : i32, i32
  }
  func.func @transform_4(%arg0: i32) -> (i32, i32) {
    %c0_i32 = arith.constant 0 : i32
    %c0_i32_0 = arith.constant 0 : i32
    %c0_i32_1 = arith.constant 0 : i32
    return %c0_i32, %c0_i32_0 : i32, i32
  }
  func.func @transform_5(%arg0: i32) -> (i32, i32) {
    %c0_i32 = arith.constant 0 : i32
    %c0_i32_0 = arith.constant 0 : i32
    return %arg0, %c0_i32 : i32, i32
  }
  func.func @transform_6(%arg0: i32) -> (i32, i32) {
    %c0_i32 = arith.constant 0 : i32
    %c0_i32_0 = arith.constant 0 : i32
    return %arg0, %c0_i32 : i32, i32
  }
}

</mosaic_0001>

<llo_original>
// kernel: tpu_custom_call.1
$region0: #{tpu_custom_call.1}
  #allocation0 [shape = 'u32[]', space=smem, size = 0x4, offset = 0x4, fixed_abs, tag = 'smem constant byte address 0x4 - core index']
  #allocation1 [shape = 'u32[144,128]{1,0:T(1,128)}', space=vmem, size = 0x12000, scoped, tag = 'internal scratch']
  %s0 = inlined_call_operand.vmem [shape: f32[8,32], index: 0, kind: input, shape index: {}]
  %s1 = inlined_call_operand.vmem [shape: f32[32,64], index: 1, kind: input, shape index: {}]
  %s2 = inlined_call_operand.vmem [shape: f32[1,64], index: 2, kind: input, shape index: {}]
  %s3 = inlined_call_operand.vmem [shape: f32[64,32], index: 3, kind: input, shape index: {}]
  %s4 = inlined_call_operand.vmem [shape: f32[1,32], index: 4, kind: input, shape index: {}]
  %s5 = inlined_call_operand.vmem [shape: f32[8,16], index: 5, kind: input, shape index: {}]
  %s6 = inlined_call_operand.hbm [shape: f32[8,128], index: 6, kind: output, shape index: {}]
  %s7 = sld [smem:[#allocation0]]
  $region34: #{tpu_custom_call.1} parent=0
    _
  %s9 = ssub.s32 1, %s7
  %s10 = scalar_select 0, %s9, %s7
  $region1: #{tpu_custom_call.1} parent=0
    #allocation2 [shape = 'u8[4096]{0}', space=vmem, size = 0x1000, scoped, tag = 'output window, operand 0, single buffered']
    #allocation3 [shape = 's32[1]{0}', space=sflag, size = 0x4, scoped, tag = 'scoped memory for tpu_custom_call.1']
    %11 = vsyncpa [#allocation3], 0
    // Predicated region
    $region2: #{tpu_custom_call.1} parent=1 // pred_check
      _
    $region3: #{tpu_custom_call.1} parent=1 // pred_check_branch
      %13 = sbr.rel (0) target = $region5
    $region4: #{tpu_custom_call.1} parent=1 // pred_region
      _
    $region5: #{tpu_custom_call.1} parent=1 // pred_fallthru
      _
    // Predicated region
    $region6: #{tpu_custom_call.1} parent=1 // pred_check
      _
    $region7: #{tpu_custom_call.1} parent=1 // pred_check_branch
      %15 = sbr.rel (0) target = $region9
    $region8: #{tpu_custom_call.1} parent=1 // pred_region
      _
    $region9: #{tpu_custom_call.1} parent=1 // pred_fallthru
      _
    // Predicated region
    $region10: #{tpu_custom_call.1} parent=1 // pred_check
      _
    $region11: #{tpu_custom_call.1} parent=1 // pred_check_branch
      %17 = sbr.rel (0) target = $region13
    $region12: #{tpu_custom_call.1} parent=1 // pred_region
      _
    $region13: #{tpu_custom_call.1} parent=1 // pred_fallthru
      _
    // Predicated region
    $region14: #{tpu_custom_call.1} parent=1 // pred_check
      _
    $region15: #{tpu_custom_call.1} parent=1 // pred_check_branch
      %19 = sbr.rel (0) target = $region17
    $region16: #{tpu_custom_call.1} parent=1 // pred_region
      _
    $region17: #{tpu_custom_call.1} parent=1 // pred_fallthru
      _
    // Predicated region
    $region18: #{tpu_custom_call.1} parent=1 // pred_check
      _
    $region19: #{tpu_custom_call.1} parent=1 // pred_check_branch
      %21 = sbr.rel (0) target = $region21
    $region20: #{tpu_custom_call.1} parent=1 // pred_region
      _
    $region21: #{tpu_custom_call.1} parent=1 // pred_fallthru
      _
    // Predicated region
    $region22: #{tpu_custom_call.1} parent=1 // pred_check
      _
    $region23: #{tpu_custom_call.1} parent=1 // pred_check_branch
      %23 = sbr.rel (0) target = $region25
    $region24: #{tpu_custom_call.1} parent=1 // pred_region
      _
    $region25: #{tpu_custom_call.1} parent=1 // pred_fallthru
      _
    %v24 = vld [vmem:[%s0] sm:$0xff]
    %v25 = vld [vmem:[%s1] sm:$0xff]
    %v26 = vld [vmem:[%s1 + $0x8] sm:$0xff]
    %v27 = vld [vmem:[%s1 + $0x10] sm:$0xff]
    %v28 = vld [vmem:[%s1 + $0x18] sm:$0xff]
    %v29 = vld [vmem:[%s2] sm:$0x1]
    %v31 = vlaneseq
    %v32 = vshrl.u32 %v31, 7
    %v33 = vsub.s32 0, %v32
    %v34 = vrot.slane %v29, %v33
    %vm36 = vcmask 261120
    %v38 = vsel %vm36, %v24, 0
    %40 = vmatprep.subr.mxu0 0.0
    %41 = vmatpush1.msra.mxu0 0.0
    %42 = vmatprep.subr.mxu0 0.0
    %43 = vmatpush1.msra.mxu0 0.0
    %44 = vmatprep.subr.mxu0 0.0
    %45 = vmatpush1.msra.mxu0 0.0
    %46 = vmatprep.subr.mxu0 0.0
    %47 = vmatpush1.msra.mxu0 0.0
    %48 = vmatprep.subr.mxu0 0.0
    %49 = vmatpush1.msra.mxu0 0.0
    %50 = vmatprep.subr.mxu0 0.0
    %51 = vmatpush1.msra.mxu0 0.0
    %52 = vmatprep.subr.mxu0 0.0
    %53 = vmatpush1.msra.mxu0 0.0
    %54 = vmatprep.subr.mxu0 0.0
    %55 = vmatpush1.msra.mxu0 0.0
    %56 = vmatprep.subr.mxu0 0.0
    %57 = vmatpush1.msra.mxu0 0.0
    %58 = vmatprep.subr.mxu0 0.0
    %59 = vmatpush1.msra.mxu0 0.0
    %60 = vmatprep.subr.mxu0 0.0
    %61 = vmatpush1.msra.mxu0 0.0
    %62 = vmatprep.subr.mxu0 0.0
    %63 = vmatpush1.msra.mxu0 0.0
    %64 = vmatprep.subr.mxu0 0.0
    %65 = vmatpush1.msra.mxu0 %v28
    %66 = vmatprep.subr.mxu0 0.0
    %67 = vmatpush1.msra.mxu0 %v27
    %68 = vmatprep.subr.mxu0 0.0
    %69 = vmatpush1.msra.mxu0 %v26
    %70 = vmatprep.subr.mxu0 0.0
    %71 = vmatpush1.msra.mxu0 %v25
    %72 = vmatprep.subr.mxu0 0.0
    %73 = vmatpush2.msra.mxu0 0.0
    %74 = vmatprep.subr.mxu0 0.0
    %75 = vmatpush2.msra.mxu0 0.0
    %76 = vmatprep.subr.mxu0 0.0
    %77 = vmatpush2.msra.mxu0 0.0
    %78 = vmatprep.subr.mxu0 0.0
    %79 = vmatpush2.msra.mxu0 0.0
    %80 = vmatprep.subr.mxu0 0.0
    %81 = vmatpush2.msra.mxu0 0.0
    %82 = vmatprep.subr.mxu0 0.0
    %83 = vmatpush2.msra.mxu0 0.0
    %84 = vmatprep.subr.mxu0 0.0
    %85 = vmatpush2.msra.mxu0 0.0
    %86 = vmatprep.subr.mxu0 0.0
    %87 = vmatpush2.msra.mxu0 0.0
    %88 = vmatprep.subr.mxu0 0.0
    %89 = vmatpush2.msra.mxu0 0.0
    %90 = vmatprep.subr.mxu0 0.0
    %91 = vmatpush2.msra.mxu0 0.0
    %92 = vmatprep.subr.mxu0 0.0
    %93 = vmatpush2.msra.mxu0 0.0
    %94 = vmatprep.subr.mxu0 0.0
    %95 = vmatpush2.msra.mxu0 0.0
    %96 = vmatprep.subr.mxu0 0.0
    %97 = vmatpush2.msra.mxu0 0.0
    %98 = vmatprep.subr.mxu0 0.0
    %99 = vmatpush2.msra.mxu0 0.0
    %100 = vmatprep.subr.mxu0 0.0
    %101 = vmatpush2.msra.mxu0 0.0
    %102 = vmatprep.subr.mxu0 0.0
    %103 = vmatpush2.msra.mxu0 0.0
    %104 = vmatprep.mubr.f32.mxu0 0.0
    %105 = vmatmul.mubr.f32.gmra.mxu0 %v38
    %v106 = vpop.f32.mrf.mxu0
    %v107 = vadd.f32 %v34, %v106
    %v108 = vpop.f32.mrf.mxu0
    %109 = vdwg.mxu0
    %v110 = vmax.f32 %v107, 0.0
    %v111 = vld [vmem:[%s3] sm:$0xff]
    %v112 = vld [vmem:[%s3 + $0x8] sm:$0xff]
    %v113 = vld [vmem:[%s3 + $0x10] sm:$0xff]
    %v114 = vld [vmem:[%s3 + $0x18] sm:$0xff]
    %v115 = vld [vmem:[%s3 + $0x20] sm:$0xff]
    %v116 = vld [vmem:[%s3 + $0x28] sm:$0xff]
    %v117 = vld [vmem:[%s3 + $0x30] sm:$0xff]
    %v118 = vld [vmem:[%s3 + $0x38] sm:$0xff]
    %v119 = vld [vmem:[%s4] sm:$0x1]
    %v121 = vlaneseq
    %v122 = vshrl.u32 %v121, 7
    %v123 = vsub.s32 0, %v122
    %v124 = vrot.slane %v119, %v123
    %vm126 = vcmask 523264
    %v128 = vsel %vm126, %v110, 0
    %130 = vmatprep.subr.mxu0 0.0
    %131 = vmatpush1.msra.mxu0 0.0
    %132 = vmatprep.subr.mxu0 0.0
    %133 = vmatpush1.msra.mxu0 0.0
    %134 = vmatprep.subr.mxu0 0.0
    %135 = vmatpush1.msra.mxu0 0.0
    %136 = vmatprep.subr.mxu0 0.0
    %137 = vmatpush1.msra.mxu0 0.0
    %138 = vmatprep.subr.mxu0 0.0
    %139 = vmatpush1.msra.mxu0 0.0
    %140 = vmatprep.subr.mxu0 0.0
    %141 = vmatpush1.msra.mxu0 0.0
    %142 = vmatprep.subr.mxu0 0.0
    %143 = vmatpush1.msra.mxu0 0.0
    %144 = vmatprep.subr.mxu0 0.0
    %145 = vmatpush1.msra.mxu0 0.0
    %146 = vmatprep.subr.mxu0 0.0
    %147 = vmatpush1.msra.mxu0 %v118
    %148 = vmatprep.subr.mxu0 0.0
    %149 = vmatpush1.msra.mxu0 %v117
    %150 = vmatprep.subr.mxu0 0.0
    %151 = vmatpush1.msra.mxu0 %v116
    %152 = vmatprep.subr.mxu0 0.0
    %153 = vmatpush1.msra.mxu0 %v115
    %154 = vmatprep.subr.mxu0 0.0
    %155 = vmatpush1.msra.mxu0 %v114
    %156 = vmatprep.subr.mxu0 0.0
    %157 = vmatpush1.msra.mxu0 %v113
    %158 = vmatprep.subr.mxu0 0.0
    %159 = vmatpush1.msra.mxu0 %v112
    %160 = vmatprep.subr.mxu0 0.0
    %161 = vmatpush1.msra.mxu0 %v111
    %162 = vmatprep.subr.mxu0 0.0
    %163 = vmatpush2.msra.mxu0 0.0
    %164 = vmatprep.subr.mxu0 0.0
    %165 = vmatpush2.msra.mxu0 0.0
    %166 = vmatprep.subr.mxu0 0.0
    %167 = vmatpush2.msra.mxu0 0.0
    %168 = vmatprep.subr.mxu0 0.0
    %169 = vmatpush2.msra.mxu0 0.0
    %170 = vmatprep.subr.mxu0 0.0
    %171 = vmatpush2.msra.mxu0 0.0
    %172 = vmatprep.subr.mxu0 0.0
    %173 = vmatpush2.msra.mxu0 0.0
    %174 = vmatprep.subr.mxu0 0.0
    %175 = vmatpush2.msra.mxu0 0.0
    %176 = vmatprep.subr.mxu0 0.0
    %177 = vmatpush2.msra.mxu0 0.0
    %178 = vmatprep.subr.mxu0 0.0
    %179 = vmatpush2.msra.mxu0 0.0
    %180 = vmatprep.subr.mxu0 0.0
    %181 = vmatpush2.msra.mxu0 0.0
    %182 = vmatprep.subr.mxu0 0.0
    %183 = vmatpush2.msra.mxu0 0.0
    %184 = vmatprep.subr.mxu0 0.0
    %185 = vmatpush2.msra.mxu0 0.0
    %186 = vmatprep.subr.mxu0 0.0
    %187 = vmatpush2.msra.mxu0 0.0
    %188 = vmatprep.subr.mxu0 0.0
    %189 = vmatpush2.msra.mxu0 0.0
    %190 = vmatprep.subr.mxu0 0.0
    %191 = vmatpush2.msra.mxu0 0.0
    %192 = vmatprep.subr.mxu0 0.0
    %193 = vmatpush2.msra.mxu0 0.0
    %194 = vmatprep.mubr.f32.mxu0 0.0
    %195 = vmatmul.mubr.f32.gmra.mxu0 %v128
    %v196 = vpop.f32.mrf.mxu0
    %v197 = vadd.f32 %v124, %v196
    %v198 = vpop.f32.mrf.mxu0
    %199 = vdwg.mxu0
    %v200 = vmul.f32 %v197, 0.5
    %v201 = vmul.f32 %v200, 1.442695
    %v202 = vpow.pop %v201
    %v203 = vld [vmem:[%s5] sm:$0xff]
    %205 = vrot.lane.b32.xlu0 %v203, 16
    %v206 = vpop.permute.xlu0 %205
    %v208 = vmul.f32 %v202, %v206
    %210 = vrot.lane.b32.xlu0 %v208, 112
    %v211 = vpop.permute.xlu0 %210
    %v213 = vadd.f32 %v197, %v211
    %215 = vrot.lane.b32.xlu0 %v197, 16
    %v216 = vpop.permute.xlu0 %215
    %vm218 = vcmask 130048
    %v219 = vsel %vm218, %v213, %v216
    %v220 = vsel %vm36, %v219, %v216
    %vm221 = vcmask 392192
    %v222 = vsel %vm221, %v220, 0.0
    %223 = vst [vmem:[#allocation2] sm:$0xff] %v222
    // Predicated region
    $region26: #{tpu_custom_call.1} parent=1 // pred_check
      _
    $region27: #{tpu_custom_call.1} parent=1 // pred_check_branch
      %225 = sbr.rel (0) target = $region29
    $region28: #{tpu_custom_call.1} parent=1 // pred_region
      %s227 = ssub.s32 128, 128
      %228 = vsyncadd [#allocation3], %s227
      %s230 = sshll.u32 [#allocation2], 4
      %s231 = int_to_ptr.vmem [resolvable:$true] %s230
      %233 = dma.vmem_to_hbm [thread:$0]  %s231, 128, %s6, [#allocation3]
    $region29: #{tpu_custom_call.1} parent=1 // pred_fallthru
      _
    // Predicated region
    $region30: #{tpu_custom_call.1} parent=1 // pred_check
      _
    $region31: #{tpu_custom_call.1} parent=1 // pred_check_branch
      %235 = sbr.rel (0) target = $region33
    $region32: #{tpu_custom_call.1} parent=1 // pred_region
      %236 = dma.done [#allocation3], 128
    $region33: #{tpu_custom_call.1} parent=1 // pred_fallthru
      _
    %237 = vsyncpa [#allocation3], 1

</llo_original>
